<compile_context>
chip_gen: v5e
topology: v5e:2x2
jax: 0.10.0
libtpu: 0.0.40
codegen_flags: <defaults>
</compile_context>

<pallas_src>
import jax
import jax.numpy as jnp
from jax.experimental import pallas as pl
from jax.experimental.pallas import tpu as pltpu

# Module dimensions (ActorCritic defaults).
D_IN = 32            # gnn_output_dim
H_ACTOR = 32         # actor_hidden_size
H_CRITIC = 32        # critic_hidden_size
ACTION_DIM = 32      # action_dim
H_PAD = 128          # lane-dense shared hidden width (actor 0:32, critic 32:64, pad 64:128)
OUT_PAD = 128        # lane-dense fused output width (actor 0:32, critic col 32, pad 33:128)
CRITIC_COL = ACTION_DIM

# Max tile rows.  Per-row VMEM footprint (f32 x + bf16 out, double buffered)
# is well under 1 KiB, so 8192-row tiles stay ~6 MiB — safe against v7x's
# 64 MiB physical / 32 MiB scoped VMEM while amortizing the ~0.35us/step
# grid overhead on v5e/v6e.
_MAX_BLOCK_B = 8192


# ---------------------------------------------------------------------------
# Fused Pallas kernel: both heads in one Linear -> ReLU -> Linear pipeline
# ---------------------------------------------------------------------------
def _fused_actor_critic_kernel(x_ref, w1_ref, b1_ref, w2_ref, b2_ref, o_ref):
    # x:  (TB, D_IN) f32
    # w1: (D_IN, H_PAD)     actor W1 -> cols [0:32], critic W1 -> cols [32:64], rest 0
    # b1: (1,  H_PAD)       f32 (actor b1 / critic b1 / zeros)
    # w2: (H_PAD, OUT_PAD)  actor W2 -> [0:32, 0:32], critic w2 -> [32:64, 32:33], rest 0
    # b2: (1,  OUT_PAD)     f32; actor b2 -> cols [0:32], critic b2 -> col 32
    # o:  (TB, OUT_PAD)     lane-dense output slab (unmasked vst), out_dtype (default bf16)
    #
    # In-kernel cast of x to the weight dtype (no-op for f32 weights, bf16 for
    # the default perf path) — avoids a separate wrapper pass over x in HBM.
    x = x_ref[...].astype(w1_ref.dtype)
    h = jnp.dot(x, w1_ref[...], preferred_element_type=jnp.float32)
    h = jnp.maximum(h + b1_ref[...], 0.0)              # bias + ReLU in f32 on the VPU
    y = jnp.dot(h.astype(w2_ref.dtype), w2_ref[...],
                preferred_element_type=jnp.float32)    # f32 accumulation on the MXU
    o_ref[...] = (y + b2_ref[...]).astype(o_ref.dtype)  # cast only at the final store


def _default_block_b(b_pad):
    """Largest multiple-of-8 tile <= _MAX_BLOCK_B giving an even grid >= 2.

    An even grid lets dimension_semantics=("parallel",) shard the batch axis
    across v7x's 2 TensorCores; on v5e/v6e (1 TC) the larger tiles simply
    amortize per-step overhead.
    """
    if b_pad < 16 or b_pad % 16 != 0:
        return b_pad                       # single block; grid = 1
    bb = min(b_pad // 2, _MAX_BLOCK_B)
    bb -= bb % 8
    while bb >= 8 and b_pad % bb != 0:
        bb -= 8
    return bb if bb >= 8 else b_pad


def fused_actor_critic_call(x, fused_params, *, block_b=None, out_dtype=jnp.bfloat16):
    """One pallas_call computing actor logits and critic value together.

    x: (B, D_IN) float  ->  (B, OUT_PAD) slab in `out_dtype`
       lanes [0:ACTION_DIM]     = actor output
       lane  CRITIC_COL         = critic value
    """
    B, d_in = x.shape
    assert d_in == D_IN, f"expected x last dim {D_IN}, got {d_in}"
    w1, b1, w2, b2 = fused_params

    # --- batch shaping (handles ragged B via host-side zero padding) ---------
    if block_b is None:
        b_pad = B if B % 8 == 0 else ((B + 7) // 8) * 8
        block_b = _default_block_b(b_pad)
    else:
        assert block_b % 8 == 0, "block_b must be a multiple of 8"
        b_pad = pl.cdiv(B, block_b) * block_b
    if b_pad != B:
        x = jnp.pad(x, ((0, b_pad - B), (0, 0)))
    assert b_pad % block_b == 0

    def _nbytes(a):
        return a.size * a.dtype.itemsize

    out_itemsize = jnp.dtype(out_dtype).itemsize
    # Real (unpadded) flops so XLA's scheduler gets an honest hint.
    real_flops = (2 * b_pad * D_IN * (H_ACTOR + H_CRITIC)
                  + 2 * b_pad * (H_ACTOR * ACTION_DIM + H_CRITIC * 1))
    cost = pl.CostEstimate(
        flops=real_flops,
        transcendentals=0,
        bytes_accessed=(_nbytes(x) + _nbytes(w1) + _nbytes(b1)
                        + _nbytes(w2) + _nbytes(b2)
                        + b_pad * OUT_PAD * out_itemsize),
    )

    grid = (b_pad // block_b,)
    out = pl.pallas_call(
        _fused_actor_critic_kernel,
        out_shape=jax.ShapeDtypeStruct((b_pad, OUT_PAD), out_dtype),
        grid_spec=pltpu.PrefetchScalarGridSpec(
            num_scalar_prefetch=0,
            grid=grid,
            in_specs=[
                pl.BlockSpec((block_b, D_IN), lambda i: (i, 0)),
                pl.BlockSpec((D_IN, H_PAD), lambda i: (0, 0)),   # resident across grid
                pl.BlockSpec((1, H_PAD), lambda i: (0, 0)),
                pl.BlockSpec((H_PAD, OUT_PAD), lambda i: (0, 0)),
                pl.BlockSpec((1, OUT_PAD), lambda i: (0, 0)),
            ],
            out_specs=pl.BlockSpec((block_b, OUT_PAD), lambda i: (i, 0)),
        ),
        compiler_params=pltpu.CompilerParams(
            # Batch axis shards across TensorCores when grid > 1 (v7x megacore).
            dimension_semantics=("parallel",),
            # Safe on v5e/v6e/v7x and far above the <=~6 MiB these tiles need.
            vmem_limit_bytes=32 * 1024 * 1024,
        ),
        cost_estimate=cost,
    )(x, w1, b1, w2, b2)

    if b_pad != B:
        out = out[:B]
    return out


# ---------------------------------------------------------------------------
# Parameter construction (mirrors nn.Module __init__ dims) + host-side fusion
# ---------------------------------------------------------------------------
def init_actor_critic_params(key,
                             gnn_output_dim=D_IN,
                             actor_hidden_size=H_ACTOR,
                             critic_hidden_size=H_CRITIC,
                             action_dim=ACTION_DIM,
                             dtype=jnp.float32):
    ks = jax.random.split(key, 8)

    def linear(kw, kb, fan_in, fan_out):
        # PyTorch nn.Linear default init: U(-1/sqrt(fan_in), 1/sqrt(fan_in)).
        bound = 1.0 / jnp.sqrt(jnp.asarray(fan_in, dtype))
        w = jax.random.uniform(kw, (fan_in, fan_out), dtype, -bound, bound)  # (in, out)
        b = jax.random.uniform(kb, (1, fan_out), dtype, -bound, bound)
        return w, b

    actor_w1, actor_b1 = linear(ks[0], ks[1], gnn_output_dim, actor_hidden_size)
    actor_w2, actor_b2 = linear(ks[2], ks[3], actor_hidden_size, action_dim)
    critic_w1, critic_b1 = linear(ks[4], ks[5], gnn_output_dim, critic_hidden_size)
    critic_w2, critic_b2 = linear(ks[6], ks[7], critic_hidden_size, 1)

    return {
        "actor": (actor_w1, actor_b1, actor_w2, actor_b2),
        "critic": (critic_w1, critic_b1, critic_w2, critic_b2),
    }


def fuse_actor_critic_params(params, weight_dtype=jnp.bfloat16):
    """Host-side, ONE-TIME packing of both heads into lane-dense padded slabs.

    Weights are stored in `weight_dtype` (default bf16 — MXU operands; no
    per-call cast).  Biases stay f32 and are added to the f32 accumulator.
    """
    aw1, ab1, aw2, ab2 = params["actor"]
    cw1, cb1, cw2, cb2 = params["critic"]

    w1 = jnp.zeros((D_IN, H_PAD), jnp.float32)
    w1 = w1.at[:, :H_ACTOR].set(aw1.astype(jnp.float32))
    w1 = w1.at[:, H_ACTOR:H_ACTOR + H_CRITIC].set(cw1.astype(jnp.float32))

    b1 = jnp.zeros((1, H_PAD), jnp.float32)
    b1 = b1.at[:, :H_ACTOR].set(ab1.astype(jnp.float32))
    b1 = b1.at[:, H_ACTOR:H_ACTOR + H_CRITIC].set(cb1.astype(jnp.float32))

    w2 = jnp.zeros((H_PAD, OUT_PAD), jnp.float32)
    w2 = w2.at[:H_ACTOR, :ACTION_DIM].set(aw2.astype(jnp.float32))
    w2 = w2.at[H_ACTOR:H_ACTOR + H_CRITIC, CRITIC_COL:CRITIC_COL + 1].set(
        cw2.astype(jnp.float32))

    b2 = jnp.zeros((1, OUT_PAD), jnp.float32)
    b2 = b2.at[:, :ACTION_DIM].set(ab2.astype(jnp.float32))
    b2 = b2.at[:, CRITIC_COL:CRITIC_COL + 1].set(cb2.astype(jnp.float32))

    return (w1.astype(weight_dtype), b1, w2.astype(weight_dtype), b2)


# ---------------------------------------------------------------------------
# ActorCritic.forward equivalent
# ---------------------------------------------------------------------------
def actor_critic_forward(fused_params, x, callee, **kwargs):
    """Matches ActorCritic.forward(x, callee) semantics for dense callees.

    NOTE: the thin head slices below are wrapper-level; when this is jitted
    together with the consumer, XLA fuses them.  For maximum efficiency hand
    the full slab from `actor_critic_forward_both(..., return_slab=True)`
    directly to the consumer instead of slicing here.
    """
    if callee == "gnn":
        # TODO(synk): QGIN over dgl.DGLGraph not implementable without the QGIN
        # source / graph connectivity; no Pallas equivalent emitted.
        raise NotImplementedError("gnn callee (QGIN over DGLGraph) not implemented")
    if callee not in ("actor", "critic"):
        raise NotImplementedError(f"Unexpected callee name: {callee}")
    slab = fused_actor_critic_call(x, fused_params, **kwargs)
    if callee == "actor":
        return slab[:, :ACTION_DIM]                       # (B, action_dim)
    return slab[:, CRITIC_COL:CRITIC_COL + 1]             # (B, 1)


def actor_critic_forward_both(fused_params, x, *, return_slab=False, **kwargs):
    """Single kernel launch returning (actor_logits, critic_value) or the slab."""
    slab = fused_actor_critic_call(x, fused_params, **kwargs)
    if return_slab:
        return slab
    return slab[:, :ACTION_DIM], slab[:, CRITIC_COL:CRITIC_COL + 1]


# ---------------------------------------------------------------------------
# Pure-JAX reference
# ---------------------------------------------------------------------------
def _reference_mlp2(x, w1, b1, w2, b2):
    h = jnp.maximum(x @ w1 + b1, 0.0)
    return h @ w2 + b2


if __name__ == "__main__":
    key = jax.random.PRNGKey(0)
    pkey, xkey, xkey2, xkey3 = jax.random.split(key, 4)

    params = init_actor_critic_params(pkey)
    fused_f32 = fuse_actor_critic_params(params, weight_dtype=jnp.float32)
    fused_bf16 = fuse_actor_critic_params(params)          # default: bf16 weights

    B = 16
    x = jax.random.normal(xkey, (B, D_IN), jnp.float32)

    ref_a = _reference_mlp2(x, *params["actor"])
    ref_c = _reference_mlp2(x, *params["critic"])

    # Exact-precision path (f32 weights, f32 output slab).
    a32, c32 = actor_critic_forward_both(fused_f32, x, out_dtype=jnp.float32)
    jax.block_until_ready(a32)
    assert a32.shape == (B, ACTION_DIM) and c32.shape == (B, 1)
    assert jnp.allclose(a32, ref_a, atol=1e-5, rtol=1e-5)
    assert jnp.allclose(c32, ref_c, atol=1e-5, rtol=1e-5)

    # Default perf path: bf16 weights + bf16 lane-dense output (f32 accumulation).
    a16, c16 = actor_critic_forward_both(fused_bf16, x)
    jax.block_until_ready(a16)
    assert a16.dtype == jnp.bfloat16 and c16.dtype == jnp.bfloat16
    assert jnp.allclose(a16.astype(jnp.float32), ref_a, atol=5e-2, rtol=5e-2)
    assert jnp.allclose(c16.astype(jnp.float32), ref_c, atol=5e-2, rtol=5e-2)

    # callee-dispatch path (module semantics).
    actor_only = actor_critic_forward(fused_f32, x, "actor", out_dtype=jnp.float32)
    critic_only = actor_critic_forward(fused_f32, x, "critic", out_dtype=jnp.float32)
    jax.block_until_ready(actor_only)
    assert jnp.allclose(actor_only, ref_a, atol=1e-5, rtol=1e-5)
    assert jnp.allclose(critic_only, ref_c, atol=1e-5, rtol=1e-5)

    # Multi-block grid coverage (explicit block_b < B).
    B2 = 32
    x2 = jax.random.normal(xkey2, (B2, D_IN), jnp.float32)
    a2, c2 = actor_critic_forward_both(fused_f32, x2, block_b=8, out_dtype=jnp.float32)
    jax.block_until_ready(a2)
    ref_a2 = _reference_mlp2(x2, *params["actor"])
    ref_c2 = _reference_mlp2(x2, *params["critic"])
    assert jnp.allclose(a2, ref_a2, atol=1e-5, rtol=1e-5)
    assert jnp.allclose(c2, ref_c2, atol=1e-5, rtol=1e-5)

    # Ragged batch coverage (padded to a multiple of 8 internally, then sliced).
    B3 = 10
    x3 = jax.random.normal(xkey3, (B3, D_IN), jnp.float32)
    a3, c3 = actor_critic_forward_both(fused_f32, x3, out_dtype=jnp.float32)
    jax.block_until_ready(a3)
    ref_a3 = _reference_mlp2(x3, *params["actor"])
    ref_c3 = _reference_mlp2(x3, *params["critic"])
    assert a3.shape == (B3, ACTION_DIM) and c3.shape == (B3, 1)
    assert jnp.allclose(a3, ref_a3, atol=1e-5, rtol=1e-5)
    assert jnp.allclose(c3, ref_c3, atol=1e-5, rtol=1e-5)

    print("KERNEL_OK")
</pallas_src>

<mosaic_0001>
module attributes {stable_mosaic.version = 11 : i64} {
  func.func @_fused_actor_critic_kernel(%arg0: i32, %arg1: memref<8x32xf32, #tpu.memory_space<vmem>>, %arg2: memref<32x128xf32, #tpu.memory_space<vmem>>, %arg3: memref<1x128xf32, #tpu.memory_space<vmem>>, %arg4: memref<128x128xf32, #tpu.memory_space<vmem>>, %arg5: memref<1x128xf32, #tpu.memory_space<vmem>>, %arg6: memref<8x128xf32, #tpu.memory_space<vmem>>) attributes {dimension_semantics = [#tpu.dimension_semantics<parallel>], iteration_bounds = array<i64: 2>, scalar_prefetch = 0 : i64, scratch_operands = 0 : i64, tpu.core_type = #tpu.core_type<tc>, window_params = [{transform_indices = @transform_0, window_bounds = array<i64: 8, 32>}, {pipeline_mode = #tpu.pipeline_mode<synchronous>, transform_indices = @transform_1, window_bounds = array<i64: 32, 128>}, {pipeline_mode = #tpu.pipeline_mode<synchronous>, transform_indices = @transform_2, window_bounds = array<i64: 1, 128>}, {pipeline_mode = #tpu.pipeline_mode<synchronous>, transform_indices = @transform_3, window_bounds = array<i64: 128, 128>}, {pipeline_mode = #tpu.pipeline_mode<synchronous>, transform_indices = @transform_4, window_bounds = array<i64: 1, 128>}, {transform_indices = @transform_5, window_bounds = array<i64: 8, 128>}]} {
    %c0 = arith.constant 0 : index
    %c0_0 = arith.constant 0 : index
    %0 = vector.load %arg1[%c0, %c0_0] : memref<8x32xf32, #tpu.memory_space<vmem>>, vector<8x32xf32>
    %c0_1 = arith.constant 0 : index
    %c0_2 = arith.constant 0 : index
    %1 = vector.load %arg2[%c0_1, %c0_2] : memref<32x128xf32, #tpu.memory_space<vmem>>, vector<32x128xf32>
    %cst = arith.constant dense<0.000000e+00> : vector<8x128xf32>
    %2 = tpu.matmul %0, %1, %cst {dimension_numbers = #tpu.dot_dimension_numbers<[1], [0], [0], [1], [0, 0, 1, 1], [], []>} : vector<8x32xf32>, vector<32x128xf32>, vector<8x128xf32> -> vector<8x128xf32>
    %c0_3 = arith.constant 0 : index
    %c0_4 = arith.constant 0 : index
    %3 = vector.load %arg3[%c0_3, %c0_4] : memref<1x128xf32, #tpu.memory_space<vmem>>, vector<1x128xf32>
    %4 = vector.broadcast %3 : vector<1x128xf32> to vector<8x128xf32>
    %5 = arith.addf %2, %4 : vector<8x128xf32>
    %cst_5 = arith.constant 0.000000e+00 : f32
    %6 = vector.broadcast %cst_5 : f32 to vector<8x128xf32>
    %7 = arith.maximumf %5, %6 : vector<8x128xf32>
    %c0_6 = arith.constant 0 : index
    %c0_7 = arith.constant 0 : index
    %8 = vector.load %arg4[%c0_6, %c0_7] : memref<128x128xf32, #tpu.memory_space<vmem>>, vector<128x128xf32>
    %cst_8 = arith.constant dense<0.000000e+00> : vector<8x128xf32>
    %9 = tpu.matmul %7, %8, %cst_8 {dimension_numbers = #tpu.dot_dimension_numbers<[1], [0], [0], [1], [0, 0, 1, 1], [], []>} : vector<8x128xf32>, vector<128x128xf32>, vector<8x128xf32> -> vector<8x128xf32>
    %c0_9 = arith.constant 0 : index
    %c0_10 = arith.constant 0 : index
    %10 = vector.load %arg5[%c0_9, %c0_10] : memref<1x128xf32, #tpu.memory_space<vmem>>, vector<1x128xf32>
    %11 = vector.broadcast %10 : vector<1x128xf32> to vector<8x128xf32>
    %12 = arith.addf %9, %11 : vector<8x128xf32>
    %c0_11 = arith.constant 0 : index
    %c0_12 = arith.constant 0 : index
    %13 = vector.load %arg6[%c0_11, %c0_12] : memref<8x128xf32, #tpu.memory_space<vmem>>, vector<8x128xf32>
    tpu.vector_store %arg6[%c0_11, %c0_12], %12 {strides = array<i32>} : memref<8x128xf32, #tpu.memory_space<vmem>>, vector<8x128xf32>,
    return
  }
  func.func @transform_0(%arg0: i32) -> (i32, i32) {
    %c0_i32 = arith.constant 0 : i32
    %c0_i32_0 = arith.constant 0 : i32
    return %arg0, %c0_i32 : i32, i32
  }
  func.func @transform_1(%arg0: i32) -> (i32, i32) {
    %c0_i32 = arith.constant 0 : i32
    %c0_i32_0 = arith.constant 0 : i32
    %c0_i32_1 = arith.constant 0 : i32
    return %c0_i32, %c0_i32_0 : i32, i32
  }
  func.func @transform_2(%arg0: i32) -> (i32, i32) {
    %c0_i32 = arith.constant 0 : i32
    %c0_i32_0 = arith.constant 0 : i32
    %c0_i32_1 = arith.constant 0 : i32
    return %c0_i32, %c0_i32_0 : i32, i32
  }
  func.func @transform_3(%arg0: i32) -> (i32, i32) {
    %c0_i32 = arith.constant 0 : i32
    %c0_i32_0 = arith.constant 0 : i32
    %c0_i32_1 = arith.constant 0 : i32
    return %c0_i32, %c0_i32_0 : i32, i32
  }
  func.func @transform_4(%arg0: i32) -> (i32, i32) {
    %c0_i32 = arith.constant 0 : i32
    %c0_i32_0 = arith.constant 0 : i32
    %c0_i32_1 = arith.constant 0 : i32
    return %c0_i32, %c0_i32_0 : i32, i32
  }
  func.func @transform_5(%arg0: i32) -> (i32, i32) {
    %c0_i32 = arith.constant 0 : i32
    %c0_i32_0 = arith.constant 0 : i32
    return %arg0, %c0_i32 : i32, i32
  }
}

</mosaic_0001>

<llo_original>
// kernel: tpu_custom_call.1
$region0: #{tpu_custom_call.1}
  #allocation0 [shape = 'u32[]', space=smem, size = 0x4, offset = 0x4, fixed_abs, tag = 'smem constant byte address 0x4 - core index']
  #allocation1 [shape = 'u32[72,128]{1,0:T(1,128)}', space=vmem, size = 0x9000, scoped, tag = 'internal scratch']
  %s0 = inlined_call_operand.hbm [shape: f32[16,32], index: 0, kind: input, shape index: {}]
  %s1 = inlined_call_operand.hbm [shape: f32[32,128], index: 1, kind: input, shape index: {}]
  %s2 = inlined_call_operand.vmem [shape: f32[1,128], index: 2, kind: input, shape index: {}]
  %s3 = inlined_call_operand.hbm [shape: f32[128,128], index: 3, kind: input, shape index: {}]
  %s4 = inlined_call_operand.vmem [shape: f32[1,128], index: 4, kind: input, shape index: {}]
  %s5 = inlined_call_operand.hbm [shape: f32[16,128], index: 5, kind: output, shape index: {}]
  %s6 = sld [smem:[#allocation0]]
  $region65: #{tpu_custom_call.1} parent=0
    _
  %s8 = ssub.s32 1, %s6
  %s9 = scalar_select 0, %s8, %s6
  $region1: #{tpu_custom_call.1} parent=0
    #allocation2 [shape = 'u8[8192]{0}', space=vmem, size = 0x2000, scoped, tag = 'input window, operand 0']
    #allocation3 [shape = 's32[2]{0}', space=sflag, size = 0x8, scoped, tag = 'scoped memory for tpu_custom_call.1']
    #allocation4 [shape = 's32[2]{0}', space=sflag, size = 0x8, scoped, tag = 'scoped memory for tpu_custom_call.1']
    #allocation5 [shape = 'u8[16384]{0}', space=vmem, size = 0x4000, scoped, tag = 'input window, operand 1, single buffered']
    #allocation6 [shape = 's32[1]{0}', space=sflag, size = 0x4, scoped, tag = 'scoped memory for tpu_custom_call.1']
    #allocation7 [shape = 'u8[65536]{0}', space=vmem, size = 0x10000, scoped, tag = 'input window, operand 3, single buffered']
    #allocation8 [shape = 'u8[8192]{0}', space=vmem, size = 0x2000, scoped, tag = 'output window, operand 0']
    %10 = vsyncpa [#allocation3], 0
    %s11 = scalar_lea.sflag [#allocation3], 1
    %12 = vsyncpa %s11, 0
    %13 = vsyncpa [#allocation6], 0
    %14 = vsyncpa [#allocation4], 0
    %s15 = scalar_lea.sflag [#allocation4], 1
    %16 = vsyncpa %s15, 0
    loop: start=0, step=1, limit=4
    $region2: #{tpu_custom_call.1} parent=1 // loop_pre_header
      _
    $region3: #{tpu_custom_call.1} parent=1 // loop_header
      %s18 = sphi 0, %s22
      %p19 = scmp.ge.s32.totalorder %s18, 4
      %s28 = sphi 0, %s30
      %s31 = sphi 0, %s28
      %s32 = sphi 0, %s31
      %s48 = sphi 0, %s32
      %s52 = sphi 0, %s52
      %s54 = sphi 0, %s52
      %s55 = sphi 0, %s54
      %s69 = sphi 0, %s55
      %s73 = sphi 0, %s73
      %s75 = sphi 0, %s73
      %s76 = sphi 0, %s75
      %s90 = sphi 0, %s76
      %s94 = sphi 0, %s94
      %s96 = sphi 0, %s94
      %s97 = sphi 0, %s96
      %s111 = sphi 0, %s97
      %s115 = sphi 0, %s115
      %s117 = sphi 0, %s115
      %s118 = sphi 0, %s117
      %s132 = sphi 0, %s118
      %s138 = sphi 0, %s140
      %s141 = sphi 0, %s138
      %s142 = sphi 0, %s141
      %s158 = sphi 0, %s142
    $region4: #{tpu_custom_call.1} parent=1 // loop_header_branch
      %21 = sbr.rel (%p19) target = $region8
    $region5: #{tpu_custom_call.1} parent=1 // loop_body
      %s23 = ssub.s32 %s18, 1
      %s24 = ssub.s32 %s18, 2
      %s25 = sadd.s32 %s18, 1
      %s26 = ssub.s32 %s18, %s25
      %p27 = scmp.eq.s32.totalorder %s26, 0
      %s29 = sadd.s32 %s28, 1
      %s30 = scalar_select %p27, %s28, %s29
      %p33 = pneg %p27
      %p34 = scmp.eq.s32.totalorder %s18, 1
      %p35 = por %p33, %p34
      %p36 = scmp.ne.s32.totalorder %s28, %s31
      %p37 = scmp.eq.s32.totalorder %s18, 0
      %p38 = por %p36, %p37
      %p39 = scmp.ne.s32.totalorder %s28, %s31
      %p40 = scmp.eq.s32.totalorder %s23, 1
      %p41 = por %p39, %p40
      %p42 = scmp.ne.s32.totalorder %s31, %s32
      %p43 = scmp.eq.s32.totalorder %s23, 0
      %p44 = por %p42, %p43
      %p45 = scmp.ne.s32.totalorder %s31, %s32
      %p46 = scmp.eq.s32.totalorder %s24, 1
      %p47 = por %p45, %p46
      %p49 = scmp.ne.s32.totalorder %s32, %s48
      %p50 = scmp.eq.s32.totalorder %s24, 0
      %p51 = por %p49, %p50
      %s53 = sadd.s32 %s52, 1
      %p56 = scmp.eq.s32.totalorder %s18, 1
      %p57 = scmp.ne.s32.totalorder %s52, %s54
      %p58 = scmp.eq.s32.totalorder %s18, 0
      %p59 = por %p57, %p58
      %p60 = scmp.ne.s32.totalorder %s52, %s54
      %p61 = scmp.eq.s32.totalorder %s23, 1
      %p62 = por %p60, %p61
      %p63 = scmp.ne.s32.totalorder %s54, %s55
      %p64 = scmp.eq.s32.totalorder %s23, 0
      %p65 = por %p63, %p64
      %p66 = scmp.ne.s32.totalorder %s54, %s55
      %p67 = scmp.eq.s32.totalorder %s24, 1
      %p68 = por %p66, %p67
      %p70 = scmp.ne.s32.totalorder %s55, %s69
      %p71 = scmp.eq.s32.totalorder %s24, 0
      %p72 = por %p70, %p71
      %s74 = sadd.s32 %s73, 1
      %p77 = scmp.eq.s32.totalorder %s18, 1
      %p78 = scmp.ne.s32.totalorder %s73, %s75
      %p79 = scmp.eq.s32.totalorder %s18, 0
      %p80 = por %p78, %p79
      %p81 = scmp.ne.s32.totalorder %s73, %s75
      %p82 = scmp.eq.s32.totalorder %s23, 1
      %p83 = por %p81, %p82
      %p84 = scmp.ne.s32.totalorder %s75, %s76
      %p85 = scmp.eq.s32.totalorder %s23, 0
      %p86 = por %p84, %p85
      %p87 = scmp.ne.s32.totalorder %s75, %s76
      %p88 = scmp.eq.s32.totalorder %s24, 1
      %p89 = por %p87, %p88
      %p91 = scmp.ne.s32.totalorder %s76, %s90
      %p92 = scmp.eq.s32.totalorder %s24, 0
      %p93 = por %p91, %p92
      %s95 = sadd.s32 %s94, 1
      %p98 = scmp.eq.s32.totalorder %s18, 1
      %p99 = scmp.ne.s32.totalorder %s94, %s96
      %p100 = scmp.eq.s32.totalorder %s18, 0
      %p101 = por %p99, %p100
      %p102 = scmp.ne.s32.totalorder %s94, %s96
      %p103 = scmp.eq.s32.totalorder %s23, 1
      %p104 = por %p102, %p103
      %p105 = scmp.ne.s32.totalorder %s96, %s97
      %p106 = scmp.eq.s32.totalorder %s23, 0
      %p107 = por %p105, %p106
      %p108 = scmp.ne.s32.totalorder %s96, %s97
      %p109 = scmp.eq.s32.totalorder %s24, 1
      %p110 = por %p108, %p109
      %p112 = scmp.ne.s32.totalorder %s97, %s111
      %p113 = scmp.eq.s32.totalorder %s24, 0
      %p114 = por %p112, %p113
      %s116 = sadd.s32 %s115, 1
      %p119 = scmp.eq.s32.totalorder %s18, 1
      %p120 = scmp.ne.s32.totalorder %s115, %s117
      %p121 = scmp.eq.s32.totalorder %s18, 0
      %p122 = por %p120, %p121
      %p123 = scmp.ne.s32.totalorder %s115, %s117
      %p124 = scmp.eq.s32.totalorder %s23, 1
      %p125 = por %p123, %p124
      %p126 = scmp.ne.s32.totalorder %s117, %s118
      %p127 = scmp.eq.s32.totalorder %s23, 0
      %p128 = por %p126, %p127
      %p129 = scmp.ne.s32.totalorder %s117, %s118
      %p130 = scmp.eq.s32.totalorder %s24, 1
      %p131 = por %p129, %p130
      %p133 = scmp.ne.s32.totalorder %s118, %s132
      %p134 = scmp.eq.s32.totalorder %s24, 0
      %p135 = por %p133, %p134
      %s136 = ssub.s32 %s18, %s25
      %p137 = scmp.eq.s32.totalorder %s136, 0
      %s139 = sadd.s32 %s138, 1
      %s140 = scalar_select %p137, %s138, %s139
      %p143 = pneg %p137
      %p144 = scmp.eq.s32.totalorder %s18, 1
      %p145 = por %p143, %p144
      %p146 = scmp.ne.s32.totalorder %s138, %s141
      %p147 = scmp.eq.s32.totalorder %s18, 0
      %p148 = por %p146, %p147
      %p149 = scmp.ne.s32.totalorder %s138, %s141
      %p150 = scmp.eq.s32.totalorder %s23, 1
      %p151 = por %p149, %p150
      %p152 = scmp.ne.s32.totalorder %s141, %s142
      %p153 = scmp.eq.s32.totalorder %s23, 0
      %p154 = por %p152, %p153
      %p155 = scmp.ne.s32.totalorder %s141, %s142
      %p156 = scmp.eq.s32.totalorder %s24, 1
      %p157 = por %p155, %p156
      %p159 = scmp.ne.s32.totalorder %s142, %s158
      %p160 = scmp.eq.s32.totalorder %s24, 0
      %p161 = por %p159, %p160
      %p162 = scmp.le.s32.totalorder 1, %s18
      %p163 = scmp.lt.s32.totalorder %s18, 3
      %p164 = pnand %p162, %p163
      %p165 = pneg %p164
      // Predicated region
      $region9: #{tpu_custom_call.1} parent=5 // pred_check
        _
      $region10: #{tpu_custom_call.1} parent=5 // pred_check_branch
        %167 = sbr.rel (%p164) target = $region12
      $region11: #{tpu_custom_call.1} parent=5 // pred_region
        %s168 = ssub.s32 %s18, 1
        // Predicated region
        $region13: #{tpu_custom_call.1} parent=11 // pred_check
          %p169 = pneg %p65
        $region14: #{tpu_custom_call.1} parent=11 // pred_check_branch
          %171 = sbr.rel (%p169) target = $region16
        $region15: #{tpu_custom_call.1} parent=11 // pred_region
          %173 = vsyncadd [#allocation6], 0
          %s174 = sshll.u32 %s1, 4
          %s175 = int_to_ptr.hbm [resolvable:$true] %s174
          %s176 = sshll.u32 [#allocation5], 4
          %s177 = int_to_ptr.vmem [resolvable:$true] %s176
          %182 = dma.hbm_to_vmem [thread:$0]  %s175, 512, %s177, [#allocation6], 128, 128, 8
        $region16: #{tpu_custom_call.1} parent=11 // pred_fallthru
          _
        // Predicated region
        $region17: #{tpu_custom_call.1} parent=11 // pred_check
          %p183 = pneg %p86
        $region18: #{tpu_custom_call.1} parent=11 // pred_check_branch
          %185 = sbr.rel (%p183) target = $region20
        $region19: #{tpu_custom_call.1} parent=11 // pred_region
          _
        $region20: #{tpu_custom_call.1} parent=11 // pred_fallthru
          _
        // Predicated region
        $region21: #{tpu_custom_call.1} parent=11 // pred_check
          %p186 = pneg %p107
        $region22: #{tpu_custom_call.1} parent=11 // pred_check_branch
          %188 = sbr.rel (%p186) target = $region24
        $region23: #{tpu_custom_call.1} parent=11 // pred_region
          %190 = vsyncadd [#allocation6], 0
          %s191 = sshll.u32 %s3, 4
          %s192 = int_to_ptr.hbm [resolvable:$true] %s191
          %s193 = sshll.u32 [#allocation7], 4
          %s194 = int_to_ptr.vmem [resolvable:$true] %s193
          %199 = dma.hbm_to_vmem [thread:$0]  %s192, 2048, %s194, [#allocation6], 128, 128, 8
        $region24: #{tpu_custom_call.1} parent=11 // pred_fallthru
          _
        // Predicated region
        $region25: #{tpu_custom_call.1} parent=11 // pred_check
          %p200 = pneg %p128
        $region26: #{tpu_custom_call.1} parent=11 // pred_check_branch
          %202 = sbr.rel (%p200) target = $region28
        $region27: #{tpu_custom_call.1} parent=11 // pred_region
          _
        $region28: #{tpu_custom_call.1} parent=11 // pred_fallthru
          _
      $region12: #{tpu_custom_call.1} parent=5 // pred_fallthru
        _
      %p203 = scmp.lt.s32.totalorder %s18, 2
      // Predicated region
      $region29: #{tpu_custom_call.1} parent=5 // pred_check
        %p204 = pneg %p203
      $region30: #{tpu_custom_call.1} parent=5 // pred_check_branch
        %206 = sbr.rel (%p204) target = $region32
      $region31: #{tpu_custom_call.1} parent=5 // pred_region
        // Predicated region
        $region33: #{tpu_custom_call.1} parent=31 // pred_check
          %p207 = pneg %p38
        $region34: #{tpu_custom_call.1} parent=31 // pred_check_branch
          %209 = sbr.rel (%p207) target = $region36
        $region35: #{tpu_custom_call.1} parent=31 // pred_region
          %s210 = sand.u32 %s28, 1
          %s211 = scalar_lea.sflag [#allocation3], %s210
          %s212 = sand.u32 %s28, 1
          %s213 = smul.addr %s212, 8
          %s214 = scalar_lea.vmem [#allocation2], %s213
          %216 = vsyncadd %s211, 0
          %s217 = smul.addr %s18, 8
          %s218 = scalar_lea.hbm %s0, %s217
          %s220 = sshll.u32 %s218, 4
          %s221 = int_to_ptr.hbm [resolvable:$true] %s220
          %s222 = sshll.u32 %s214, 4
          %s223 = int_to_ptr.vmem [resolvable:$true] %s222
          %225 = dma.hbm_to_vmem [thread:$0]  %s221, 128, %s223, %s211
        $region36: #{tpu_custom_call.1} parent=31 // pred_fallthru
          _
      $region32: #{tpu_custom_call.1} parent=5 // pred_fallthru
        _
      %p226 = scmp.le.s32.totalorder 1, %s18
      %p227 = scmp.lt.s32.totalorder %s18, 3
      %p228 = pnand %p226, %p227
      %p229 = pneg %p228
      // Predicated region
      $region37: #{tpu_custom_call.1} parent=5 // pred_check
        _
      $region38: #{tpu_custom_call.1} parent=5 // pred_check_branch
        %231 = sbr.rel (%p228) target = $region40
      $region39: #{tpu_custom_call.1} parent=5 // pred_region
        %s232 = ssub.s32 %s18, 1
        %s233 = sand.u32 %s31, 1
        %s234 = scalar_lea.sflag [#allocation3], %s233
        %s235 = sand.u32 %s31, 1
        %s236 = smul.addr %s235, 8
        %s237 = scalar_lea.vmem [#allocation2], %s236
        // Predicated region
        $region41: #{tpu_custom_call.1} parent=39 // pred_check
          %p238 = pneg %p44
        $region42: #{tpu_custom_call.1} parent=39 // pred_check_branch
          %240 = sbr.rel (%p238) target = $region44
        $region43: #{tpu_custom_call.1} parent=39 // pred_region
          %242 = dma.done %s234, 128
        $region44: #{tpu_custom_call.1} parent=39 // pred_fallthru
          _
        // Predicated region
        $region45: #{tpu_custom_call.1} parent=39 // pred_check
          %p243 = pneg %p65
        $region46: #{tpu_custom_call.1} parent=39 // pred_check_branch
          %245 = sbr.rel (%p243) target = $region48
        $region47: #{tpu_custom_call.1} parent=39 // pred_region
          %247 = dma.done [#allocation6], 512
        $region48: #{tpu_custom_call.1} parent=39 // pred_fallthru
          _
        // Predicated region
        $region49: #{tpu_custom_call.1} parent=39 // pred_check
          %p248 = pneg %p107
        $region50: #{tpu_custom_call.1} parent=39 // pred_check_branch
          %250 = sbr.rel (%p248) target = $region52
        $region51: #{tpu_custom_call.1} parent=39 // pred_region
          %252 = dma.done [#allocation6], 2048
        $region52: #{tpu_custom_call.1} parent=39 // pred_fallthru
          _
        %s253 = sand.u32 %s31, 1
        %s254 = scalar_lea.sflag [#allocation3], %s253
        %s255 = sand.u32 %s31, 1
        %s256 = smul.addr %s255, 8
        %s257 = scalar_lea.vmem [#allocation2], %s256
        %p258 = pneg %p44
        %p259 = pneg %p41
        %p260 = pneg %p65
        %p261 = pneg %p62
        %p262 = pneg %p86
        %p263 = pneg %p83
        %p264 = pneg %p107
        %p265 = pneg %p104
        %p266 = pneg %p128
        %p267 = pneg %p125
        %p268 = pneg %p154
        %p269 = pneg %p151
        %s270 = sand.u32 %s141, 1
        %s271 = scalar_lea.sflag [#allocation4], %s270
        %s272 = sand.u32 %s141, 1
        %s273 = smul.addr %s272, 8
        %s274 = scalar_lea.vmem [#allocation8], %s273
        %v275 = vld [vmem:[%s237] sm:$0xff]
        %v276 = vld [vmem:[#allocation5] sm:$0xff]
        %v277 = vld [vmem:[#allocation5 + $0x8] sm:$0xff]
        %v278 = vld [vmem:[#allocation5 + $0x10] sm:$0xff]
        %v279 = vld [vmem:[#allocation5 + $0x18] sm:$0xff]
        %v280 = vld [vmem:[%s2] sm:$0x1]
        %v282 = vperm.slane %v280, 0
        %vm284 = vcmask 261120
        %v286 = vsel %vm284, %v275, 0
        %288 = vmatpush.msra.mxu0 0.0
        %289 = vmatpush.msra.mxu0 0.0
        %290 = vmatpush.msra.mxu0 0.0
        %291 = vmatpush.msra.mxu0 0.0
        %292 = vmatpush.msra.mxu0 0.0
        %293 = vmatpush.msra.mxu0 0.0
        %294 = vmatpush.msra.mxu0 0.0
        %295 = vmatpush.msra.mxu0 0.0
        %296 = vmatpush.msra.mxu0 0.0
        %297 = vmatpush.msra.mxu0 0.0
        %298 = vmatpush.msra.mxu0 0.0
        %299 = vmatpush.msra.mxu0 0.0
        %300 = vmatpush.msra.mxu0 %v279
        %301 = vmatpush.msra.mxu0 %v278
        %302 = vmatpush.msra.mxu0 %v277
        %303 = vmatpush.msra.mxu0 %v276
        %304 = vmatmul.f32.gmra.mxu0 %v286
        %v305 = vpop.f32.mrf.mxu0
        %v306 = vadd.f32 %v282, %v305
        %307 = vdwg.mxu0
        %v308 = vmax.f32 %v306, 0.0
        %v309 = vld [vmem:[#allocation7] sm:$0xff]
        %v310 = vld [vmem:[#allocation7 + $0x8] sm:$0xff]
        %v311 = vld [vmem:[#allocation7 + $0x10] sm:$0xff]
        %v312 = vld [vmem:[#allocation7 + $0x18] sm:$0xff]
        %v313 = vld [vmem:[#allocation7 + $0x20] sm:$0xff]
        %v314 = vld [vmem:[#allocation7 + $0x28] sm:$0xff]
        %v315 = vld [vmem:[#allocation7 + $0x30] sm:$0xff]
        %v316 = vld [vmem:[#allocation7 + $0x38] sm:$0xff]
        %v317 = vld [vmem:[#allocation7 + $0x40] sm:$0xff]
        %v318 = vld [vmem:[#allocation7 + $0x48] sm:$0xff]
        %v319 = vld [vmem:[#allocation7 + $0x50] sm:$0xff]
        %v320 = vld [vmem:[#allocation7 + $0x58] sm:$0xff]
        %v321 = vld [vmem:[#allocation7 + $0x60] sm:$0xff]
        %v322 = vld [vmem:[#allocation7 + $0x68] sm:$0xff]
        %v323 = vld [vmem:[#allocation7 + $0x70] sm:$0xff]
        %v324 = vld [vmem:[#allocation7 + $0x78] sm:$0xff]
        %v325 = vld [vmem:[%s4] sm:$0x1]
        %v327 = vperm.slane %v325, 0
        %329 = vmatpush.msra.mxu0 %v324
        %330 = vmatpush.msra.mxu0 %v323
        %331 = vmatpush.msra.mxu0 %v322
        %332 = vmatpush.msra.mxu0 %v321
        %333 = vmatpush.msra.mxu0 %v320
        %334 = vmatpush.msra.mxu0 %v319
        %335 = vmatpush.msra.mxu0 %v318
        %336 = vmatpush.msra.mxu0 %v317
        %337 = vmatpush.msra.mxu0 %v316
        %338 = vmatpush.msra.mxu0 %v315
        %339 = vmatpush.msra.mxu0 %v314
        %340 = vmatpush.msra.mxu0 %v313
        %341 = vmatpush.msra.mxu0 %v312
        %342 = vmatpush.msra.mxu0 %v311
        %343 = vmatpush.msra.mxu0 %v310
        %344 = vmatpush.msra.mxu0 %v309
        %345 = vmatmul.f32.gmra.mxu0 %v308
        %v346 = vpop.f32.mrf.mxu0
        %v347 = vadd.f32 %v327, %v346
        %348 = vdwg.mxu0
        %349 = vst [vmem:[%s274] sm:$0xff] %v347
        %s350 = sand.u32 %s141, 1
        %s351 = scalar_lea.sflag [#allocation4], %s350
        %s352 = sand.u32 %s141, 1
        %s353 = smul.addr %s352, 8
        %s354 = scalar_lea.vmem [#allocation8], %s353
        // Predicated region
        $region53: #{tpu_custom_call.1} parent=39 // pred_check
          %p355 = pneg %p151
        $region54: #{tpu_custom_call.1} parent=39 // pred_check_branch
          %357 = sbr.rel (%p355) target = $region56
        $region55: #{tpu_custom_call.1} parent=39 // pred_region
          %359 = vsyncadd %s351, 0
          %s360 = smul.addr %s23, 8
          %s361 = scalar_lea.hbm %s5, %s360
          %s363 = sshll.u32 %s354, 4
          %s364 = int_to_ptr.vmem [resolvable:$true] %s363
          %s365 = sshll.u32 %s361, 4
          %s366 = int_to_ptr.hbm [resolvable:$true] %s365
          %368 = dma.vmem_to_hbm [thread:$0]  %s364, 128, %s366, %s351
        $region56: #{tpu_custom_call.1} parent=39 // pred_fallthru
          _
      $region40: #{tpu_custom_call.1} parent=5 // pred_fallthru
        _
      %p369 = scmp.le.s32.totalorder 2, %s18
      // Predicated region
      $region57: #{tpu_custom_call.1} parent=5 // pred_check
        %p370 = pneg %p369
      $region58: #{tpu_custom_call.1} parent=5 // pred_check_branch
        %372 = sbr.rel (%p370) target = $region60
      $region59: #{tpu_custom_call.1} parent=5 // pred_region
        %s373 = ssub.s32 %s18, 2
        // Predicated region
        $region61: #{tpu_custom_call.1} parent=59 // pred_check
          %p374 = pneg %p157
        $region62: #{tpu_custom_call.1} parent=59 // pred_check_branch
          %376 = sbr.rel (%p374) target = $region64
        $region63: #{tpu_custom_call.1} parent=59 // pred_region
          %s377 = sand.u32 %s142, 1
          %s378 = scalar_lea.sflag [#allocation4], %s377
          %s379 = sand.u32 %s142, 1
          %s380 = smul.addr %s379, 8
          %s381 = scalar_lea.vmem [#allocation8], %s380
          %383 = dma.done %s378, 128
        $region64: #{tpu_custom_call.1} parent=59 // pred_fallthru
          _
      $region60: #{tpu_custom_call.1} parent=5 // pred_fallthru
        _
    $region6: #{tpu_custom_call.1} parent=1 // loop_footer
      %s22 = sadd.s32 1, %s18
    $region7: #{tpu_custom_call.1} parent=1 // loop_footer_branch
      %17 = sbr.rel target = $region3
    $region8: #{tpu_custom_call.1} parent=1 // loop_exit
      _
    %384 = vsyncpa [#allocation3], 1
    %s385 = scalar_lea.sflag [#allocation3], 1
    %386 = vsyncpa %s385, 1
    %387 = vsyncpa [#allocation6], 1
    %388 = vsyncpa [#allocation4], 1
    %s389 = scalar_lea.sflag [#allocation4], 1
    %390 = vsyncpa %s389, 1

</llo_original>
